<compile_context>
chip_gen: v6e
topology: v6e:2x2x1
jax: 0.10.0
libtpu: 0.0.40
codegen_flags: <defaults>
</compile_context>

<pallas_src>
import jax
import jax.numpy as jnp
from jax.experimental import pallas as pl
from jax.experimental.pallas import tpu as pltpu

N_STATES = 2
HIDDEN = 50
HIDDEN_PAD = 128
N_VALUE = 1


def _sigmoid_f32(z):
    # EUP-friendly sigmoid: one tanh (EUP slot) + 2 VPU ops, no divide.
    return 0.5 * jnp.tanh(0.5 * z) + 0.5


def mlp_kernel(x_ref, w1_ref, b1_ref, w2_ref, b2_ref, w3_ref, b3_ref, o_ref):
    x = x_ref[...]                                    # (TB, 2) f32
    w1 = w1_ref[...]                                  # (2, 128) f32

    # fc1 (K=2): two VPU broadcast-FMAs instead of a degenerate MXU matmul.
    h1 = x[:, 0:1] * w1[0:1, :] + x[:, 1:2] * w1[1:2, :]
    h1 = _sigmoid_f32(h1 + b1_ref[...])               # (TB, 128) f32

    # fc2: the only real matmul -> MXU, bf16 operands, f32 accumulation.
    h2 = jnp.dot(h1.astype(jnp.bfloat16), w2_ref[...],
                 preferred_element_type=jnp.float32)
    h2 = _sigmoid_f32(h2 + b2_ref[...])               # (TB, 128) f32

    # out (N=1): elementwise multiply + lane reduction (VPU/XLU), no MXU.
    y = jnp.sum(h2 * w3_ref[...], axis=-1, keepdims=True) + b3_ref[...]
    o_ref[...] = y.astype(o_ref.dtype)


def _round_up(n, m):
    return ((n + m - 1) // m) * m


def net_forward(x, w1, b1, w2, b2, w3, b3, *, tile_b=2048):
    assert tile_b % 8 == 0, "batch tile must be a multiple of 8 sublanes"
    batch, k = x.shape
    n_out = b3.shape[1]

    # Batch tile: large to amortize per-step overhead, hard-capped at 4096 for
    # the VMEM budget (lane-padded x/out blocks count 64-128x their logical
    # size), and capped at ceil(batch/2) (rounded to 8) so the grid has at
    # least 2 steps and both v7x TensorCores get work.
    half_batch = _round_up((batch + 1) // 2, 8)
    tb = max(8, min(tile_b, 4096, half_batch))
    pb = _round_up(batch, tb)
    if pb != batch:
        x = jnp.pad(x, ((0, pb - batch), (0, 0)))
    grid = (pb // tb,)

    # Advisory cost estimate (per whole call, padded batch).
    weight_bytes = (w1.size * 4 + b1.size * 4 + w2.size * 2 + b2.size * 4
                    + w3.size * 4 + b3.size * 4)
    cost = pl.CostEstimate(
        flops=2 * pb * HIDDEN_PAD * HIDDEN_PAD        # fc2
              + 2 * pb * N_STATES * HIDDEN_PAD        # fc1
              + 2 * pb * HIDDEN_PAD,                  # fc3 reduction
        transcendentals=2 * pb * HIDDEN_PAD,          # two sigmoids (tanh)
        bytes_accessed=pb * k * 4 + pb * n_out * 4 + weight_bytes,
    )

    out = pl.pallas_call(
        mlp_kernel,
        out_shape=jax.ShapeDtypeStruct((pb, n_out), jnp.float32),
        grid=grid,
        in_specs=[
            # x is streamed tile-by-tile over the batch.
            pl.BlockSpec((tb, k), lambda i: (i, 0)),
            # Weights/biases: constant index_map -> VMEM-resident across steps.
            pl.BlockSpec(w1.shape, lambda i: (0, 0)),
            pl.BlockSpec(b1.shape, lambda i: (0, 0)),
            pl.BlockSpec(w2.shape, lambda i: (0, 0)),
            pl.BlockSpec(b2.shape, lambda i: (0, 0)),
            pl.BlockSpec(w3.shape, lambda i: (0, 0)),
            pl.BlockSpec(b3.shape, lambda i: (0, 0)),
        ],
        out_specs=pl.BlockSpec((tb, n_out), lambda i: (i, 0)),
        compiler_params=pltpu.CompilerParams(
            dimension_semantics=("parallel",),
            vmem_limit_bytes=48 * 1024 * 1024,
        ),
        cost_estimate=cost,
    )(x, w1, b1, w2, b2, w3, b3)
    return out[:batch]


def init_params(key):
    """Synthetic weights (not a checkpoint). Returns (padded, unpadded)."""
    k1, k2, k3, k4, k5, k6 = jax.random.split(key, 6)
    w1 = jax.random.normal(k1, (N_STATES, HIDDEN), jnp.float32) * 0.1
    b1 = jax.random.normal(k2, (1, HIDDEN), jnp.float32) * 0.1
    w2 = jax.random.normal(k3, (HIDDEN, HIDDEN), jnp.float32) * 0.1
    b2 = jax.random.normal(k4, (1, HIDDEN), jnp.float32) * 0.1
    # Output layer stored as a row vector (1, HIDDEN) for the lane reduction.
    w3 = jax.random.normal(k5, (1, HIDDEN), jnp.float32) * 0.1
    b3 = jax.random.normal(k6, (1, N_VALUE), jnp.float32) * 0.1

    ph = HIDDEN_PAD - HIDDEN
    padded = (
        jnp.pad(w1, ((0, 0), (0, ph))),               # zero cols -> padded h1 pre-act = 0
        jnp.pad(b1, ((0, 0), (0, ph))),               # zero bias on padded cols
        jnp.pad(w2, ((0, ph), (0, ph))).astype(jnp.bfloat16),  # zero ROWS kill sigmoid(0)=0.5
        jnp.pad(b2, ((0, 0), (0, ph))),
        jnp.pad(w3, ((0, 0), (0, ph))),               # zero cols annihilate padded h2
        b3,
    )
    unpadded = (w1, b1, w2, b2, w3, b3)
    return padded, unpadded


def reference(x, params):
    w1, b1, w2, b2, w3, b3 = params
    hp = jax.lax.Precision.HIGHEST
    h = jax.nn.sigmoid(jnp.dot(x, w1, precision=hp) + b1)
    h = jax.nn.sigmoid(jnp.dot(h, w2, precision=hp) + b2)
    return jnp.dot(h, w3.T, precision=hp) + b3


if __name__ == "__main__":
    key = jax.random.PRNGKey(0)
    pkey, xkey1, xkey2 = jax.random.split(key, 3)
    padded_params, ref_params = init_params(pkey)

    # bf16 fc2 operands -> loosened tolerance vs the HIGHEST-precision f32 ref.
    ATOL = 2e-2
    RTOL = 2e-2

    # Case 1: multi-tile grid (batch=64 -> tb=32 via the half-batch cap -> 2 steps).
    x1 = jax.random.normal(xkey1, (64, N_STATES), jnp.float32)
    out1 = jax.block_until_ready(net_forward(x1, *padded_params))
    ref1 = reference(x1, ref_params)
    assert out1.shape == (64, N_VALUE)
    assert jnp.allclose(out1, ref1, atol=ATOL, rtol=RTOL), "mismatch (batch=64)"

    # Case 2: small, non-multiple-of-8 batch exercising the padding path.
    x2 = jax.random.normal(xkey2, (7, N_STATES), jnp.float32)
    out2 = jax.block_until_ready(net_forward(x2, *padded_params))
    ref2 = reference(x2, ref_params)
    assert out2.shape == (7, N_VALUE)
    assert jnp.allclose(out2, ref2, atol=ATOL, rtol=RTOL), "mismatch (batch=7)"

    print("KERNEL_OK")
</pallas_src>

<mosaic_0001>
module attributes {stable_mosaic.version = 11 : i64} {
  func.func @mlp_kernel(%arg0: i32, %arg1: memref<32x2xf32, #tpu.memory_space<vmem>>, %arg2: memref<2x128xf32, #tpu.memory_space<vmem>>, %arg3: memref<1x128xf32, #tpu.memory_space<vmem>>, %arg4: memref<128x128xbf16, #tpu.memory_space<vmem>>, %arg5: memref<1x128xf32, #tpu.memory_space<vmem>>, %arg6: memref<1x128xf32, #tpu.memory_space<vmem>>, %arg7: memref<1x1xf32, #tpu.memory_space<vmem>>, %arg8: memref<32x1xf32, #tpu.memory_space<vmem>>) attributes {dimension_semantics = [#tpu.dimension_semantics<parallel>], iteration_bounds = array<i64: 2>, scalar_prefetch = 0 : i64, scratch_operands = 0 : i64, tpu.core_type = #tpu.core_type<tc>, window_params = [{transform_indices = @transform_0, window_bounds = array<i64: 32, 2>}, {pipeline_mode = #tpu.pipeline_mode<synchronous>, transform_indices = @transform_1, window_bounds = array<i64: 2, 128>}, {pipeline_mode = #tpu.pipeline_mode<synchronous>, transform_indices = @transform_2, window_bounds = array<i64: 1, 128>}, {pipeline_mode = #tpu.pipeline_mode<synchronous>, transform_indices = @transform_3, window_bounds = array<i64: 128, 128>}, {pipeline_mode = #tpu.pipeline_mode<synchronous>, transform_indices = @transform_4, window_bounds = array<i64: 1, 128>}, {pipeline_mode = #tpu.pipeline_mode<synchronous>, transform_indices = @transform_5, window_bounds = array<i64: 1, 128>}, {pipeline_mode = #tpu.pipeline_mode<synchronous>, transform_indices = @transform_6, window_bounds = array<i64: 1, 1>}, {transform_indices = @transform_7, window_bounds = array<i64: 32, 1>}]} {
    %c0 = arith.constant 0 : index
    %c0_0 = arith.constant 0 : index
    %0 = vector.load %arg1[%c0, %c0_0] : memref<32x2xf32, #tpu.memory_space<vmem>>, vector<32x2xf32>
    %c0_1 = arith.constant 0 : index
    %c0_2 = arith.constant 0 : index
    %1 = vector.load %arg2[%c0_1, %c0_2] : memref<2x128xf32, #tpu.memory_space<vmem>>, vector<2x128xf32>
    %2 = vector.extract_strided_slice %0 {offsets = [0, 0], sizes = [32, 1], strides = [1, 1]} : vector<32x2xf32> to vector<32x1xf32>
    %3 = vector.extract_strided_slice %1 {offsets = [0, 0], sizes = [1, 128], strides = [1, 1]} : vector<2x128xf32> to vector<1x128xf32>
    %4 = vector.broadcast %2 : vector<32x1xf32> to vector<32x128xf32>
    %5 = vector.broadcast %3 : vector<1x128xf32> to vector<32x128xf32>
    %6 = arith.mulf %4, %5 : vector<32x128xf32>
    %7 = vector.extract_strided_slice %0 {offsets = [0, 1], sizes = [32, 1], strides = [1, 1]} : vector<32x2xf32> to vector<32x1xf32>
    %8 = vector.extract_strided_slice %1 {offsets = [1, 0], sizes = [1, 128], strides = [1, 1]} : vector<2x128xf32> to vector<1x128xf32>
    %9 = vector.broadcast %7 : vector<32x1xf32> to vector<32x128xf32>
    %10 = vector.broadcast %8 : vector<1x128xf32> to vector<32x128xf32>
    %11 = arith.mulf %9, %10 : vector<32x128xf32>
    %12 = arith.addf %6, %11 : vector<32x128xf32>
    %c0_3 = arith.constant 0 : index
    %c0_4 = arith.constant 0 : index
    %13 = vector.load %arg3[%c0_3, %c0_4] : memref<1x128xf32, #tpu.memory_space<vmem>>, vector<1x128xf32>
    %14 = vector.broadcast %13 : vector<1x128xf32> to vector<32x128xf32>
    %15 = arith.addf %12, %14 : vector<32x128xf32>
    %cst = arith.constant 5.000000e-01 : f32
    %16 = vector.broadcast %cst : f32 to vector<32x128xf32>
    %17 = arith.mulf %16, %15 : vector<32x128xf32>
    %18 = math.tanh %17 : vector<32x128xf32>
    %cst_5 = arith.constant 5.000000e-01 : f32
    %19 = vector.broadcast %cst_5 : f32 to vector<32x128xf32>
    %20 = arith.mulf %19, %18 : vector<32x128xf32>
    %cst_6 = arith.constant 5.000000e-01 : f32
    %21 = vector.broadcast %cst_6 : f32 to vector<32x128xf32>
    %22 = arith.addf %20, %21 : vector<32x128xf32>
    %23 = arith.truncf %22 : vector<32x128xf32> to vector<32x128xbf16>
    %c0_7 = arith.constant 0 : index
    %c0_8 = arith.constant 0 : index
    %24 = vector.load %arg4[%c0_7, %c0_8] : memref<128x128xbf16, #tpu.memory_space<vmem>>, vector<128x128xbf16>
    %cst_9 = arith.constant dense<0.000000e+00> : vector<32x128xf32>
    %25 = tpu.matmul %23, %24, %cst_9 {dimension_numbers = #tpu.dot_dimension_numbers<[1], [0], [0], [1], [0, 0, 1, 1], [], []>} : vector<32x128xbf16>, vector<128x128xbf16>, vector<32x128xf32> -> vector<32x128xf32>
    %c0_10 = arith.constant 0 : index
    %c0_11 = arith.constant 0 : index
    %26 = vector.load %arg5[%c0_10, %c0_11] : memref<1x128xf32, #tpu.memory_space<vmem>>, vector<1x128xf32>
    %27 = vector.broadcast %26 : vector<1x128xf32> to vector<32x128xf32>
    %28 = arith.addf %25, %27 : vector<32x128xf32>
    %cst_12 = arith.constant 5.000000e-01 : f32
    %29 = vector.broadcast %cst_12 : f32 to vector<32x128xf32>
    %30 = arith.mulf %29, %28 : vector<32x128xf32>
    %31 = math.tanh %30 : vector<32x128xf32>
    %cst_13 = arith.constant 5.000000e-01 : f32
    %32 = vector.broadcast %cst_13 : f32 to vector<32x128xf32>
    %33 = arith.mulf %32, %31 : vector<32x128xf32>
    %cst_14 = arith.constant 5.000000e-01 : f32
    %34 = vector.broadcast %cst_14 : f32 to vector<32x128xf32>
    %35 = arith.addf %33, %34 : vector<32x128xf32>
    %c0_15 = arith.constant 0 : index
    %c0_16 = arith.constant 0 : index
    %36 = vector.load %arg6[%c0_15, %c0_16] : memref<1x128xf32, #tpu.memory_space<vmem>>, vector<1x128xf32>
    %37 = vector.broadcast %36 : vector<1x128xf32> to vector<32x128xf32>
    %38 = arith.mulf %35, %37 : vector<32x128xf32>
    %cst_17 = arith.constant dense<0.000000e+00> : vector<32xf32>
    %39 = vector.multi_reduction <add>, %38, %cst_17 [1] : vector<32x128xf32> to vector<32xf32>
    %40 = vector.shape_cast %39 : vector<32xf32> to vector<32x1xf32>
    %c0_18 = arith.constant 0 : index
    %c0_19 = arith.constant 0 : index
    %41 = vector.load %arg7[%c0_18, %c0_19] : memref<1x1xf32, #tpu.memory_space<vmem>>, vector<1x1xf32>
    %42 = vector.broadcast %41 : vector<1x1xf32> to vector<32x1xf32>
    %43 = arith.addf %40, %42 : vector<32x1xf32>
    %c0_20 = arith.constant 0 : index
    %c0_21 = arith.constant 0 : index
    %44 = vector.load %arg8[%c0_20, %c0_21] : memref<32x1xf32, #tpu.memory_space<vmem>>, vector<32x1xf32>
    tpu.vector_store %arg8[%c0_20, %c0_21], %43 {strides = array<i32>} : memref<32x1xf32, #tpu.memory_space<vmem>>, vector<32x1xf32>,
    return
  }
  func.func @transform_0(%arg0: i32) -> (i32, i32) {
    %c0_i32 = arith.constant 0 : i32
    %c0_i32_0 = arith.constant 0 : i32
    return %arg0, %c0_i32 : i32, i32
  }
  func.func @transform_1(%arg0: i32) -> (i32, i32) {
    %c0_i32 = arith.constant 0 : i32
    %c0_i32_0 = arith.constant 0 : i32
    %c0_i32_1 = arith.constant 0 : i32
    return %c0_i32, %c0_i32_0 : i32, i32
  }
  func.func @transform_2(%arg0: i32) -> (i32, i32) {
    %c0_i32 = arith.constant 0 : i32
    %c0_i32_0 = arith.constant 0 : i32
    %c0_i32_1 = arith.constant 0 : i32
    return %c0_i32, %c0_i32_0 : i32, i32
  }
  func.func @transform_3(%arg0: i32) -> (i32, i32) {
    %c0_i32 = arith.constant 0 : i32
    %c0_i32_0 = arith.constant 0 : i32
    %c0_i32_1 = arith.constant 0 : i32
    return %c0_i32, %c0_i32_0 : i32, i32
  }
  func.func @transform_4(%arg0: i32) -> (i32, i32) {
    %c0_i32 = arith.constant 0 : i32
    %c0_i32_0 = arith.constant 0 : i32
    %c0_i32_1 = arith.constant 0 : i32
    return %c0_i32, %c0_i32_0 : i32, i32
  }
  func.func @transform_5(%arg0: i32) -> (i32, i32) {
    %c0_i32 = arith.constant 0 : i32
    %c0_i32_0 = arith.constant 0 : i32
    %c0_i32_1 = arith.constant 0 : i32
    return %c0_i32, %c0_i32_0 : i32, i32
  }
  func.func @transform_6(%arg0: i32) -> (i32, i32) {
    %c0_i32 = arith.constant 0 : i32
    %c0_i32_0 = arith.constant 0 : i32
    %c0_i32_1 = arith.constant 0 : i32
    return %c0_i32, %c0_i32_0 : i32, i32
  }
  func.func @transform_7(%arg0: i32) -> (i32, i32) {
    %c0_i32 = arith.constant 0 : i32
    %c0_i32_0 = arith.constant 0 : i32
    return %arg0, %c0_i32 : i32, i32
  }
}

</mosaic_0001>

<llo_original>
// kernel: tpu_custom_call.1
$region0: #{tpu_custom_call.1}
  #allocation0 [shape = 'u32[]', space=smem, size = 0x4, offset = 0x4, fixed_abs, tag = 'smem constant byte address 0x4 - core index']
  #allocation1 [shape = 'u32[144,128]{1,0:T(1,128)}', space=vmem, size = 0x12000, scoped, tag = 'internal scratch']
  #allocation2 [shape = 'f32[1,1]{1,0:T(1,128)S(1)}', space=vmem, size = 0x200, scoped, tag = 'scoped memory for tpu_custom_call.1']
  %s0 = inlined_call_operand.vmem [shape: f32[64,2], index: 0, kind: input, shape index: {}]
  %s1 = inlined_call_operand.vmem [shape: f32[2,128], index: 1, kind: input, shape index: {}]
  %s2 = inlined_call_operand.vmem [shape: f32[1,128], index: 2, kind: input, shape index: {}]
  %s3 = inlined_call_operand.vmem [shape: bf16[128,128], index: 3, kind: input, shape index: {}]
  %s4 = inlined_call_operand.vmem [shape: f32[1,128], index: 4, kind: input, shape index: {}]
  %s5 = inlined_call_operand.vmem [shape: f32[1,128], index: 5, kind: input, shape index: {}]
  %s6 = inlined_call_operand.<no memory space> [shape: f32[1,1], index: 6, kind: input, shape index: {}]
  %s7 = inlined_call_operand.vmem [shape: f32[64,1], index: 7, kind: output, shape index: {}]
  %s8 = sld [smem:[#allocation0]]
  $region61: #{tpu_custom_call.1} parent=0
    _
  %s10 = ssub.s32 1, %s8
  %s11 = scalar_select 0, %s10, %s8
  %v12 = vstv %s6
  %13 = vst [vmem:[#allocation2] sm:$0x1] %v12
  loop: start=0, step=1, limit=4
  $region2: #{tpu_custom_call.1} parent=0 // loop_pre_header
    _
  $region3: #{tpu_custom_call.1} parent=0 // loop_header
    %s15 = sphi 0, %s19
    %p16 = scmp.ge.s32.totalorder %s15, 4
    %s25 = sphi 0, %s27
    %s28 = sphi 0, %s25
    %s29 = sphi 0, %s28
    %s45 = sphi 0, %s29
    %s49 = sphi 0, %s49
    %s51 = sphi 0, %s49
    %s52 = sphi 0, %s51
    %s66 = sphi 0, %s52
    %s70 = sphi 0, %s70
    %s72 = sphi 0, %s70
    %s73 = sphi 0, %s72
    %s87 = sphi 0, %s73
    %s91 = sphi 0, %s91
    %s93 = sphi 0, %s91
    %s94 = sphi 0, %s93
    %s108 = sphi 0, %s94
    %s112 = sphi 0, %s112
    %s114 = sphi 0, %s112
    %s115 = sphi 0, %s114
    %s129 = sphi 0, %s115
    %s133 = sphi 0, %s133
    %s135 = sphi 0, %s133
    %s136 = sphi 0, %s135
    %s150 = sphi 0, %s136
    %s154 = sphi 0, %s154
    %s156 = sphi 0, %s154
    %s157 = sphi 0, %s156
    %s171 = sphi 0, %s157
    %s177 = sphi 0, %s179
    %s180 = sphi 0, %s177
    %s181 = sphi 0, %s180
    %s197 = sphi 0, %s181
  $region4: #{tpu_custom_call.1} parent=0 // loop_header_branch
    %18 = sbr.rel (%p16) target = $region8
  $region5: #{tpu_custom_call.1} parent=0 // loop_body
    %s20 = ssub.s32 %s15, 1
    %s21 = ssub.s32 %s15, 2
    %s22 = sadd.s32 %s15, 1
    %s23 = ssub.s32 %s15, %s22
    %p24 = scmp.eq.s32.totalorder %s23, 0
    %s26 = sadd.s32 %s25, 1
    %s27 = scalar_select %p24, %s25, %s26
    %p30 = pneg %p24
    %p31 = scmp.eq.s32.totalorder %s15, 1
    %p32 = por %p30, %p31
    %p33 = scmp.ne.s32.totalorder %s25, %s28
    %p34 = scmp.eq.s32.totalorder %s15, 0
    %p35 = por %p33, %p34
    %p36 = scmp.ne.s32.totalorder %s25, %s28
    %p37 = scmp.eq.s32.totalorder %s20, 1
    %p38 = por %p36, %p37
    %p39 = scmp.ne.s32.totalorder %s28, %s29
    %p40 = scmp.eq.s32.totalorder %s20, 0
    %p41 = por %p39, %p40
    %p42 = scmp.ne.s32.totalorder %s28, %s29
    %p43 = scmp.eq.s32.totalorder %s21, 1
    %p44 = por %p42, %p43
    %p46 = scmp.ne.s32.totalorder %s29, %s45
    %p47 = scmp.eq.s32.totalorder %s21, 0
    %p48 = por %p46, %p47
    %s50 = sadd.s32 %s49, 1
    %p53 = scmp.eq.s32.totalorder %s15, 1
    %p54 = scmp.ne.s32.totalorder %s49, %s51
    %p55 = scmp.eq.s32.totalorder %s15, 0
    %p56 = por %p54, %p55
    %p57 = scmp.ne.s32.totalorder %s49, %s51
    %p58 = scmp.eq.s32.totalorder %s20, 1
    %p59 = por %p57, %p58
    %p60 = scmp.ne.s32.totalorder %s51, %s52
    %p61 = scmp.eq.s32.totalorder %s20, 0
    %p62 = por %p60, %p61
    %p63 = scmp.ne.s32.totalorder %s51, %s52
    %p64 = scmp.eq.s32.totalorder %s21, 1
    %p65 = por %p63, %p64
    %p67 = scmp.ne.s32.totalorder %s52, %s66
    %p68 = scmp.eq.s32.totalorder %s21, 0
    %p69 = por %p67, %p68
    %s71 = sadd.s32 %s70, 1
    %p74 = scmp.eq.s32.totalorder %s15, 1
    %p75 = scmp.ne.s32.totalorder %s70, %s72
    %p76 = scmp.eq.s32.totalorder %s15, 0
    %p77 = por %p75, %p76
    %p78 = scmp.ne.s32.totalorder %s70, %s72
    %p79 = scmp.eq.s32.totalorder %s20, 1
    %p80 = por %p78, %p79
    %p81 = scmp.ne.s32.totalorder %s72, %s73
    %p82 = scmp.eq.s32.totalorder %s20, 0
    %p83 = por %p81, %p82
    %p84 = scmp.ne.s32.totalorder %s72, %s73
    %p85 = scmp.eq.s32.totalorder %s21, 1
    %p86 = por %p84, %p85
    %p88 = scmp.ne.s32.totalorder %s73, %s87
    %p89 = scmp.eq.s32.totalorder %s21, 0
    %p90 = por %p88, %p89
    %s92 = sadd.s32 %s91, 1
    %p95 = scmp.eq.s32.totalorder %s15, 1
    %p96 = scmp.ne.s32.totalorder %s91, %s93
    %p97 = scmp.eq.s32.totalorder %s15, 0
    %p98 = por %p96, %p97
    %p99 = scmp.ne.s32.totalorder %s91, %s93
    %p100 = scmp.eq.s32.totalorder %s20, 1
    %p101 = por %p99, %p100
    %p102 = scmp.ne.s32.totalorder %s93, %s94
    %p103 = scmp.eq.s32.totalorder %s20, 0
    %p104 = por %p102, %p103
    %p105 = scmp.ne.s32.totalorder %s93, %s94
    %p106 = scmp.eq.s32.totalorder %s21, 1
    %p107 = por %p105, %p106
    %p109 = scmp.ne.s32.totalorder %s94, %s108
    %p110 = scmp.eq.s32.totalorder %s21, 0
    %p111 = por %p109, %p110
    %s113 = sadd.s32 %s112, 1
    %p116 = scmp.eq.s32.totalorder %s15, 1
    %p117 = scmp.ne.s32.totalorder %s112, %s114
    %p118 = scmp.eq.s32.totalorder %s15, 0
    %p119 = por %p117, %p118
    %p120 = scmp.ne.s32.totalorder %s112, %s114
    %p121 = scmp.eq.s32.totalorder %s20, 1
    %p122 = por %p120, %p121
    %p123 = scmp.ne.s32.totalorder %s114, %s115
    %p124 = scmp.eq.s32.totalorder %s20, 0
    %p125 = por %p123, %p124
    %p126 = scmp.ne.s32.totalorder %s114, %s115
    %p127 = scmp.eq.s32.totalorder %s21, 1
    %p128 = por %p126, %p127
    %p130 = scmp.ne.s32.totalorder %s115, %s129
    %p131 = scmp.eq.s32.totalorder %s21, 0
    %p132 = por %p130, %p131
    %s134 = sadd.s32 %s133, 1
    %p137 = scmp.eq.s32.totalorder %s15, 1
    %p138 = scmp.ne.s32.totalorder %s133, %s135
    %p139 = scmp.eq.s32.totalorder %s15, 0
    %p140 = por %p138, %p139
    %p141 = scmp.ne.s32.totalorder %s133, %s135
    %p142 = scmp.eq.s32.totalorder %s20, 1
    %p143 = por %p141, %p142
    %p144 = scmp.ne.s32.totalorder %s135, %s136
    %p145 = scmp.eq.s32.totalorder %s20, 0
    %p146 = por %p144, %p145
    %p147 = scmp.ne.s32.totalorder %s135, %s136
    %p148 = scmp.eq.s32.totalorder %s21, 1
    %p149 = por %p147, %p148
    %p151 = scmp.ne.s32.totalorder %s136, %s150
    %p152 = scmp.eq.s32.totalorder %s21, 0
    %p153 = por %p151, %p152
    %s155 = sadd.s32 %s154, 1
    %p158 = scmp.eq.s32.totalorder %s15, 1
    %p159 = scmp.ne.s32.totalorder %s154, %s156
    %p160 = scmp.eq.s32.totalorder %s15, 0
    %p161 = por %p159, %p160
    %p162 = scmp.ne.s32.totalorder %s154, %s156
    %p163 = scmp.eq.s32.totalorder %s20, 1
    %p164 = por %p162, %p163
    %p165 = scmp.ne.s32.totalorder %s156, %s157
    %p166 = scmp.eq.s32.totalorder %s20, 0
    %p167 = por %p165, %p166
    %p168 = scmp.ne.s32.totalorder %s156, %s157
    %p169 = scmp.eq.s32.totalorder %s21, 1
    %p170 = por %p168, %p169
    %p172 = scmp.ne.s32.totalorder %s157, %s171
    %p173 = scmp.eq.s32.totalorder %s21, 0
    %p174 = por %p172, %p173
    %s175 = ssub.s32 %s15, %s22
    %p176 = scmp.eq.s32.totalorder %s175, 0
    %s178 = sadd.s32 %s177, 1
    %s179 = scalar_select %p176, %s177, %s178
    %p182 = pneg %p176
    %p183 = scmp.eq.s32.totalorder %s15, 1
    %p184 = por %p182, %p183
    %p185 = scmp.ne.s32.totalorder %s177, %s180
    %p186 = scmp.eq.s32.totalorder %s15, 0
    %p187 = por %p185, %p186
    %p188 = scmp.ne.s32.totalorder %s177, %s180
    %p189 = scmp.eq.s32.totalorder %s20, 1
    %p190 = por %p188, %p189
    %p191 = scmp.ne.s32.totalorder %s180, %s181
    %p192 = scmp.eq.s32.totalorder %s20, 0
    %p193 = por %p191, %p192
    %p194 = scmp.ne.s32.totalorder %s180, %s181
    %p195 = scmp.eq.s32.totalorder %s21, 1
    %p196 = por %p194, %p195
    %p198 = scmp.ne.s32.totalorder %s181, %s197
    %p199 = scmp.eq.s32.totalorder %s21, 0
    %p200 = por %p198, %p199
    %p201 = scmp.le.s32.totalorder 1, %s15
    %p202 = scmp.lt.s32.totalorder %s15, 3
    %p203 = pnand %p201, %p202
    %p204 = pneg %p203
    // Predicated region
    $region9: #{tpu_custom_call.1} parent=5 // pred_check
      _
    $region10: #{tpu_custom_call.1} parent=5 // pred_check_branch
      %206 = sbr.rel (%p203) target = $region12
    $region11: #{tpu_custom_call.1} parent=5 // pred_region
      %s207 = ssub.s32 %s15, 1
      // Predicated region
      $region13: #{tpu_custom_call.1} parent=11 // pred_check
        %p208 = pneg %p62
      $region14: #{tpu_custom_call.1} parent=11 // pred_check_branch
        %210 = sbr.rel (%p208) target = $region16
      $region15: #{tpu_custom_call.1} parent=11 // pred_region
        _
      $region16: #{tpu_custom_call.1} parent=11 // pred_fallthru
        _
      // Predicated region
      $region17: #{tpu_custom_call.1} parent=11 // pred_check
        %p211 = pneg %p83
      $region18: #{tpu_custom_call.1} parent=11 // pred_check_branch
        %213 = sbr.rel (%p211) target = $region20
      $region19: #{tpu_custom_call.1} parent=11 // pred_region
        _
      $region20: #{tpu_custom_call.1} parent=11 // pred_fallthru
        _
      // Predicated region
      $region21: #{tpu_custom_call.1} parent=11 // pred_check
        %p214 = pneg %p104
      $region22: #{tpu_custom_call.1} parent=11 // pred_check_branch
        %216 = sbr.rel (%p214) target = $region24
      $region23: #{tpu_custom_call.1} parent=11 // pred_region
        _
      $region24: #{tpu_custom_call.1} parent=11 // pred_fallthru
        _
      // Predicated region
      $region25: #{tpu_custom_call.1} parent=11 // pred_check
        %p217 = pneg %p125
      $region26: #{tpu_custom_call.1} parent=11 // pred_check_branch
        %219 = sbr.rel (%p217) target = $region28
      $region27: #{tpu_custom_call.1} parent=11 // pred_region
        _
      $region28: #{tpu_custom_call.1} parent=11 // pred_fallthru
        _
      // Predicated region
      $region29: #{tpu_custom_call.1} parent=11 // pred_check
        %p220 = pneg %p146
      $region30: #{tpu_custom_call.1} parent=11 // pred_check_branch
        %222 = sbr.rel (%p220) target = $region32
      $region31: #{tpu_custom_call.1} parent=11 // pred_region
        _
      $region32: #{tpu_custom_call.1} parent=11 // pred_fallthru
        _
      // Predicated region
      $region33: #{tpu_custom_call.1} parent=11 // pred_check
        %p223 = pneg %p167
      $region34: #{tpu_custom_call.1} parent=11 // pred_check_branch
        %225 = sbr.rel (%p223) target = $region36
      $region35: #{tpu_custom_call.1} parent=11 // pred_region
        _
      $region36: #{tpu_custom_call.1} parent=11 // pred_fallthru
        _
    $region12: #{tpu_custom_call.1} parent=5 // pred_fallthru
      _
    %p226 = scmp.lt.s32.totalorder %s15, 2
    // Predicated region
    $region37: #{tpu_custom_call.1} parent=5 // pred_check
      %p227 = pneg %p226
    $region38: #{tpu_custom_call.1} parent=5 // pred_check_branch
      %229 = sbr.rel (%p227) target = $region40
    $region39: #{tpu_custom_call.1} parent=5 // pred_region
      // Predicated region
      $region41: #{tpu_custom_call.1} parent=39 // pred_check
        %p230 = pneg %p35
      $region42: #{tpu_custom_call.1} parent=39 // pred_check_branch
        %232 = sbr.rel (%p230) target = $region44
      $region43: #{tpu_custom_call.1} parent=39 // pred_region
        %s233 = smul.u32 4, %s15
        %p234 = scmp.lt.s32.totalorder %s233, 7
        %s235 = scalar_select %p234, %s233, 7
        %s236 = smul.addr %s235, 8
        %s237 = scalar_lea.vmem %s0, %s236
        %s238 = smul.u32 4, %s15
      $region44: #{tpu_custom_call.1} parent=39 // pred_fallthru
        _
    $region40: #{tpu_custom_call.1} parent=5 // pred_fallthru
      _
    %p239 = scmp.le.s32.totalorder 1, %s15
    %p240 = scmp.lt.s32.totalorder %s15, 3
    %p241 = pnand %p239, %p240
    %p242 = pneg %p241
    // Predicated region
    $region45: #{tpu_custom_call.1} parent=5 // pred_check
      _
    $region46: #{tpu_custom_call.1} parent=5 // pred_check_branch
      %244 = sbr.rel (%p241) target = $region48
    $region47: #{tpu_custom_call.1} parent=5 // pred_region
      %s245 = ssub.s32 %s15, 1
      %s246 = smul.u32 4, %s20
      %p247 = scmp.lt.s32.totalorder %s246, 7
      %s248 = scalar_select %p247, %s246, 7
      %s249 = smul.addr %s248, 8
      %s250 = scalar_lea.vmem %s0, %s249
      %p251 = pneg %p41
      %p252 = pneg %p38
      %p253 = pneg %p62
      %p254 = pneg %p59
      %p255 = pneg %p83
      %p256 = pneg %p80
      %p257 = pneg %p104
      %p258 = pneg %p101
      %p259 = pneg %p125
      %p260 = pneg %p122
      %p261 = pneg %p146
      %p262 = pneg %p143
      %p263 = pneg %p167
      %p264 = pneg %p164
      %p265 = pneg %p193
      %p266 = pneg %p190
      %s267 = smul.u32 4, %s20
      %p268 = scmp.lt.s32.totalorder %s267, 7
      %s269 = scalar_select %p268, %s267, 7
      %s270 = smul.addr %s269, 8
      %s271 = scalar_lea.vmem %s7, %s270
      %s272 = smul.u32 4, %s20
      %p273 = scmp.lt.s32.totalorder %s272, 7
      %s274 = scalar_select %p273, %s272, 7
      %s275 = smul.addr %s274, 8
      %s276 = scalar_lea.vmem %s0, %s275
      %s277 = smul.u32 4, %s20
      %s278 = smul.u32 4, %s20
      %p279 = scmp.lt.s32.totalorder %s278, 7
      %s280 = scalar_select %p279, %s278, 7
      %s281 = smul.addr %s280, 8
      %s282 = scalar_lea.vmem %s7, %s281
      %s283 = smul.u32 4, %s20
      %v285 = vld [vmem:[%s276] sm:$0xff]
      %v286 = vld [vmem:[%s276 + $0x8] sm:$0xff]
      %v287 = vld [vmem:[%s276 + $0x10] sm:$0xff]
      %v288 = vld [vmem:[%s276 + $0x18] sm:$0xff]
      %v289 = vld [vmem:[%s1] sm:$0x3]
      %291 = vset.pattern.permute.xlu0 0
      %292 = vperm.xlu0 %291, %v285
      %v293 = vpop.permute.xlu0 %292
      %296 = vset.pattern.permute.xlu0 0
      %297 = vperm.xlu0 %296, %v286
      %v298 = vpop.permute.xlu0 %297
      %301 = vset.pattern.permute.xlu0 0
      %302 = vperm.xlu0 %301, %v287
      %v303 = vpop.permute.xlu0 %302
      %306 = vset.pattern.permute.xlu0 0
      %307 = vperm.xlu0 %306, %v288
      %v308 = vpop.permute.xlu0 %307
      %v310 = vlaneseq
      %v311 = vshrl.u32 %v310, 7
      %v312 = vsub.s32 0, %v311
      %v313 = vrot.slane %v289, %v312
      %v314 = vmul.f32 %v293, %v313
      %v315 = vmul.f32 %v298, %v313
      %v316 = vmul.f32 %v303, %v313
      %v317 = vmul.f32 %v308, %v313
      %318 = vset.pattern.permute.xlu0 1
      %319 = vperm.xlu0 %318, %v285
      %v320 = vpop.permute.xlu0 %319
      %322 = vset.pattern.permute.xlu0 1
      %323 = vperm.xlu0 %322, %v286
      %v324 = vpop.permute.xlu0 %323
      %326 = vset.pattern.permute.xlu0 1
      %327 = vperm.xlu0 %326, %v287
      %v328 = vpop.permute.xlu0 %327
      %330 = vset.pattern.permute.xlu0 1
      %331 = vperm.xlu0 %330, %v288
      %v332 = vpop.permute.xlu0 %331
      %v334 = vlaneseq
      %v335 = vshrl.u32 %v334, 7
      %v336 = vsub.s32 1, %v335
      %v337 = vrot.slane %v289, %v336
      %v338 = vmul.f32 %v320, %v337
      %v339 = vmul.f32 %v324, %v337
      %v340 = vmul.f32 %v328, %v337
      %v341 = vmul.f32 %v332, %v337
      %v342 = vadd.f32 %v314, %v338
      %v343 = vadd.f32 %v315, %v339
      %v344 = vadd.f32 %v316, %v340
      %v345 = vadd.f32 %v317, %v341
      %v346 = vld [vmem:[%s2] sm:$0x1]
      %v348 = vlaneseq
      %v349 = vshrl.u32 %v348, 7
      %v350 = vsub.s32 0, %v349
      %v351 = vrot.slane %v346, %v350
      %v353 = vadd.f32 %v342, %v351
      %v354 = vadd.f32 %v343, %v351
      %v355 = vadd.f32 %v344, %v351
      %v356 = vadd.f32 %v345, %v351
      %v357 = vmul.f32 %v353, 0.5
      %v358 = vmul.f32 %v354, 0.5
      %v359 = vmul.f32 %v355, 0.5
      %v360 = vmul.f32 %v356, 0.5
      %v361 = vtanh.pop %v357
      %v362 = vtanh.pop %v358
      %v363 = vtanh.pop %v359
      %v364 = vtanh.pop %v360
      %v365 = vmul.f32 %v361, 0.5
      %v366 = vmul.f32 %v362, 0.5
      %v367 = vmul.f32 %v363, 0.5
      %v368 = vmul.f32 %v364, 0.5
      %v369 = vadd.f32 %v365, 0.5
      %v370 = vadd.f32 %v366, 0.5
      %v371 = vadd.f32 %v367, 0.5
      %v372 = vadd.f32 %v368, 0.5
      %v373 = vpack.c.bf16 %v370, %v369
      %v374 = vpack.c.bf16 %v372, %v371
      %v375 = vld [vmem:[%s3] sm:$0xf]
      %v376 = vld [vmem:[%s3 + $0x4] sm:$0xf]
      %v377 = vld [vmem:[%s3 + $0x8] sm:$0xf]
      %v378 = vld [vmem:[%s3 + $0xc] sm:$0xf]
      %v379 = vld [vmem:[%s3 + $0x10] sm:$0xf]
      %v380 = vld [vmem:[%s3 + $0x14] sm:$0xf]
      %v381 = vld [vmem:[%s3 + $0x18] sm:$0xf]
      %v382 = vld [vmem:[%s3 + $0x1c] sm:$0xf]
      %v383 = vld [vmem:[%s3 + $0x20] sm:$0xf]
      %v384 = vld [vmem:[%s3 + $0x24] sm:$0xf]
      %v385 = vld [vmem:[%s3 + $0x28] sm:$0xf]
      %v386 = vld [vmem:[%s3 + $0x2c] sm:$0xf]
      %v387 = vld [vmem:[%s3 + $0x30] sm:$0xf]
      %v388 = vld [vmem:[%s3 + $0x34] sm:$0xf]
      %v389 = vld [vmem:[%s3 + $0x38] sm:$0xf]
      %v390 = vld [vmem:[%s3 + $0x3c] sm:$0xf]
      %v391 = vld [vmem:[%s4] sm:$0x1]
      %v393 = vlaneseq
      %v394 = vshrl.u32 %v393, 7
      %v395 = vsub.s32 0, %v394
      %v396 = vrot.slane %v391, %v395
      %v414 = vunpack.c.l.b16 %v375
      %v415 = vunpack.c.l.b16 %v376
      %v416 = vunpack.c.l.b16 %v377
      %v417 = vunpack.c.l.b16 %v378
      %v418 = vunpack.c.l.b16 %v379
      %v419 = vunpack.c.l.b16 %v380
      %v420 = vunpack.c.l.b16 %v381
      %v421 = vunpack.c.l.b16 %v382
      %v422 = vunpack.c.l.b16 %v383
      %v423 = vunpack.c.l.b16 %v384
      %v424 = vunpack.c.l.b16 %v385
      %v425 = vunpack.c.l.b16 %v386
      %v426 = vunpack.c.l.b16 %v387
      %v427 = vunpack.c.l.b16 %v388
      %v428 = vunpack.c.l.b16 %v389
      %v429 = vunpack.c.l.b16 %v390
      %v430 = vpack.c.b16 %v415, %v414
      %v431 = vpack.c.b16 %v417, %v416
      %v432 = vpack.c.b16 %v419, %v418
      %v433 = vpack.c.b16 %v421, %v420
      %v434 = vpack.c.b16 %v423, %v422
      %v435 = vpack.c.b16 %v425, %v424
      %v436 = vpack.c.b16 %v427, %v426
      %v437 = vpack.c.b16 %v429, %v428
      %446 = vmatprep.subr.bf16.mxu0 0
      %447 = vmatpush1.bf16.msra.mxu0 %v437
      %448 = vmatprep.subr.bf16.mxu0 0
      %449 = vmatpush1.bf16.msra.mxu0 %v436
      %450 = vmatprep.subr.bf16.mxu0 0
      %451 = vmatpush1.bf16.msra.mxu0 %v435
      %452 = vmatprep.subr.bf16.mxu0 0
      %453 = vmatpush1.bf16.msra.mxu0 %v434
      %454 = vmatprep.subr.bf16.mxu0 0
      %455 = vmatpush1.bf16.msra.mxu0 %v433
      %456 = vmatprep.subr.bf16.mxu0 0
      %457 = vmatpush1.bf16.msra.mxu0 %v432
      %458 = vmatprep.subr.bf16.mxu0 0
      %459 = vmatpush1.bf16.msra.mxu0 %v431
      %460 = vmatprep.subr.bf16.mxu0 0
      %461 = vmatpush1.bf16.msra.mxu0 %v430
      %462 = vmatprep.subr.bf16.mxu0 0
      %463 = vmatpush2.bf16.msra.mxu0 0
      %464 = vmatprep.subr.bf16.mxu0 0
      %465 = vmatpush2.bf16.msra.mxu0 0
      %466 = vmatprep.subr.bf16.mxu0 0
      %467 = vmatpush2.bf16.msra.mxu0 0
      %468 = vmatprep.subr.bf16.mxu0 0
      %469 = vmatpush2.bf16.msra.mxu0 0
      %470 = vmatprep.subr.bf16.mxu0 0
      %471 = vmatpush2.bf16.msra.mxu0 0
      %472 = vmatprep.subr.bf16.mxu0 0
      %473 = vmatpush2.bf16.msra.mxu0 0
      %474 = vmatprep.subr.bf16.mxu0 0
      %475 = vmatpush2.bf16.msra.mxu0 0
      %476 = vmatprep.subr.bf16.mxu0 0
      %477 = vmatpush2.bf16.msra.mxu0 0
      %478 = vmatprep.mubr.bf16.mxu0 0
      %479 = vmatmul.mubr.bf16.gmra.mxu0 %v373
      %v480 = vpop.f32.mrf.mxu0
      %v481 = vadd.f32 %v396, %v480
      %v482 = vpop.f32.mrf.mxu0
      %v483 = vpop.f32.mrf.mxu0
      %v484 = vadd.f32 %v396, %v483
      %v485 = vpop.f32.mrf.mxu0
      %486 = vmatprep.mubr.bf16.mxu0 0
      %487 = vmatmul.mubr.bf16.gmra.mxu0 %v374
      %v488 = vpop.f32.mrf.mxu0
      %v489 = vadd.f32 %v396, %v488
      %v490 = vpop.f32.mrf.mxu0
      %v491 = vpop.f32.mrf.mxu0
      %v492 = vadd.f32 %v396, %v491
      %v493 = vpop.f32.mrf.mxu0
      %494 = vdwg.mxu0
      %v495 = vmul.f32 %v481, 0.5
      %v496 = vmul.f32 %v484, 0.5
      %v497 = vmul.f32 %v489, 0.5
      %v498 = vmul.f32 %v492, 0.5
      %v499 = vtanh.pop %v495
      %v500 = vtanh.pop %v496
      %v501 = vtanh.pop %v497
      %v502 = vtanh.pop %v498
      %v503 = vmul.f32 %v499, 0.5
      %v504 = vmul.f32 %v500, 0.5
      %v505 = vmul.f32 %v501, 0.5
      %v506 = vmul.f32 %v502, 0.5
      %v507 = vadd.f32 %v503, 0.5
      %v508 = vadd.f32 %v504, 0.5
      %v509 = vadd.f32 %v505, 0.5
      %v510 = vadd.f32 %v506, 0.5
      %v511 = vld [vmem:[%s5] sm:$0x1]
      %v513 = vlaneseq
      %v514 = vshrl.u32 %v513, 7
      %v515 = vsub.s32 0, %v514
      %v516 = vrot.slane %v511, %v515
      %v518 = vmul.f32 %v507, %v516
      %v519 = vmul.f32 %v508, %v516
      %v520 = vmul.f32 %v509, %v516
      %v521 = vmul.f32 %v510, %v516
      %522 = vadd.xlane.f32.xlu0 %v518
      %v523 = vpop.xlane.xlu0 %522
      %524 = vadd.xlane.f32.xlu0 %v519
      %v525 = vpop.xlane.xlu0 %524
      %526 = vadd.xlane.f32.xlu0 %v520
      %v527 = vpop.xlane.xlu0 %526
      %528 = vadd.xlane.f32.xlu0 %v521
      %v529 = vpop.xlane.xlu0 %528
      %v530 = vld [vmem:[#allocation2] sm:$0x1]
      %v532 = vlaneseq
      %v533 = vshrl.u32 %v532, 7
      %v534 = vsub.s32 0, %v533
      %v535 = vrot.slane %v530, %v534
      %v537 = vadd.f32 %v523, %v535
      %v538 = vadd.f32 %v525, %v535
      %v539 = vadd.f32 %v527, %v535
      %v540 = vadd.f32 %v529, %v535
      %vm541 = vcmask 7168
      %542 = vst.msk [vmem:[%s282] sm:$0xff] %vm541, %v537
      %543 = vst.msk [vmem:[%s282 + $0x8] sm:$0xff] %vm541, %v538
      %544 = vst.msk [vmem:[%s282 + $0x10] sm:$0xff] %vm541, %v539
      %545 = vst.msk [vmem:[%s282 + $0x18] sm:$0xff] %vm541, %v540
      %s546 = smul.u32 4, %s20
      %p547 = scmp.lt.s32.totalorder %s546, 7
      %s548 = scalar_select %p547, %s546, 7
      %s549 = smul.addr %s548, 8
      %s550 = scalar_lea.vmem %s7, %s549
      // Predicated region
      $region49: #{tpu_custom_call.1} parent=47 // pred_check
        %p551 = pneg %p190
      $region50: #{tpu_custom_call.1} parent=47 // pred_check_branch
        %553 = sbr.rel (%p551) target = $region52
      $region51: #{tpu_custom_call.1} parent=47 // pred_region
        %s554 = smul.u32 4, %s20
      $region52: #{tpu_custom_call.1} parent=47 // pred_fallthru
        _
    $region48: #{tpu_custom_call.1} parent=5 // pred_fallthru
      _
    %p555 = scmp.le.s32.totalorder 2, %s15
    // Predicated region
    $region53: #{tpu_custom_call.1} parent=5 // pred_check
      %p556 = pneg %p555
    $region54: #{tpu_custom_call.1} parent=5 // pred_check_branch
      %558 = sbr.rel (%p556) target = $region56
    $region55: #{tpu_custom_call.1} parent=5 // pred_region
      %s559 = ssub.s32 %s15, 2
      // Predicated region
      $region57: #{tpu_custom_call.1} parent=55 // pred_check
        %p560 = pneg %p196
      $region58: #{tpu_custom_call.1} parent=55 // pred_check_branch
        %562 = sbr.rel (%p560) target = $region60
      $region59: #{tpu_custom_call.1} parent=55 // pred_region
        %s563 = smul.u32 4, %s21
        %p564 = scmp.lt.s32.totalorder %s563, 7
        %s565 = scalar_select %p564, %s563, 7
        %s566 = smul.addr %s565, 8
        %s567 = scalar_lea.vmem %s7, %s566
      $region60: #{tpu_custom_call.1} parent=55 // pred_fallthru
        _
    $region56: #{tpu_custom_call.1} parent=5 // pred_fallthru
      _
  $region6: #{tpu_custom_call.1} parent=0 // loop_footer
    %s19 = sadd.s32 1, %s15
  $region7: #{tpu_custom_call.1} parent=0 // loop_footer_branch
    %14 = sbr.rel target = $region3
  $region8: #{tpu_custom_call.1} parent=0 // loop_exit
    _

</llo_original>
